<compile_context>
chip_gen: v7x
topology: tpu7x:2x2x1
jax: 0.10.0
libtpu: 0.0.40
codegen_flags: <defaults>
</compile_context>

<pallas_src>
import math

import jax
import jax.numpy as jnp
from jax.experimental import pallas as pl
from jax.experimental.pallas import tpu as pltpu


def _round_up(n: int, m: int) -> int:
    return ((n + m - 1) // m) * m


def _freq_table(dim: int) -> jax.Array:
    """Exactly the frequency table the PyTorch module builds (f32)."""
    half_dim = dim // 2
    scale = math.log(10000.0) / (half_dim - 1)
    return jnp.exp(jnp.arange(half_dim, dtype=jnp.float32) * (-scale))  # (half_dim,)


def _make_kernel(k: int):
    """Kernel closure over the static packing factor k."""

    def kernel(x_ref, tbl_ref, out_ref):
        # x_ref:   (tile_rows, k)   f32 timesteps (k packed batch rows per row)
        # tbl_ref: (3, W)           f32: [freqs | phase | lane-group id], W = k*dim
        # out_ref: (tile_rows, W)   output, full-lane-width contiguous store
        freqs = tbl_ref[0:1, :]
        phase = tbl_ref[1:2, :]
        if k == 1:
            xb = x_ref[...]                       # (rows, 1) lane-broadcasts
        else:
            grp = tbl_ref[2:3, :]                 # group id per lane (0..k-1)
            xb = x_ref[:, 0:1]
            for j in range(1, k):                 # static, short where-chain
                xb = jnp.where(grp == jnp.float32(j), x_ref[:, j:j + 1], xb)
        # cos(t) = sin(t + pi/2): one transcendental per element, one dense store.
        out_ref[...] = jnp.sin(xb * freqs + phase).astype(out_ref.dtype)

    return kernel


def sinusoidal_pos_emb(x: jax.Array, dim: int, *,
                       tile_bytes: int = 2 << 20,
                       out_dtype=jnp.float32) -> jax.Array:
    """x: (B,) timesteps -> (B, dim) sinusoidal embeddings (f32 by default)."""
    assert dim % 2 == 0 and dim >= 4, "dim must be even and >= 4 (half_dim - 1 > 0)"
    half_dim = dim // 2
    B = x.shape[0]

    # Lane-dense packing factor: k batch rows per 128-lane output row.
    if dim < 128 and 128 % dim == 0 and B % (128 // dim) == 0:
        k = 128 // dim
    else:
        k = 1
    W = k * dim
    n_rows = B // k

    # Constant table, built once in the wrapper (not per-tile in the kernel).
    freqs = _freq_table(dim)                                             # (half,)
    freqs_full = jnp.concatenate([freqs, freqs])                         # (dim,)
    phase_full = jnp.concatenate(
        [jnp.zeros((half_dim,), jnp.float32),
         jnp.full((half_dim,), math.pi / 2.0, dtype=jnp.float32)])       # (dim,)
    tbl = jnp.stack([
        jnp.tile(freqs_full, k),                                         # row 0: freqs
        jnp.tile(phase_full, k),                                         # row 1: phase
        jnp.repeat(jnp.arange(k, dtype=jnp.float32), dim),               # row 2: group id
    ])                                                                   # (3, W)

    # dim-aware tile: ~tile_bytes of output rows (multiple of 8 sublanes), or the
    # whole array when it is smaller than one tile (block dim == full array dim
    # is always legal, no padding needed).
    rows_target = max(8, _round_up(max(1, tile_bytes // (W * 4)), 8))
    tile_rows = n_rows if n_rows <= rows_target else rows_target

    x2d = x.astype(jnp.float32).reshape(n_rows, k)
    grid = (pl.cdiv(n_rows, tile_rows),)

    out = pl.pallas_call(
        _make_kernel(k),
        out_shape=jax.ShapeDtypeStruct((n_rows, W), out_dtype),
        grid=grid,
        in_specs=[
            pl.BlockSpec((tile_rows, k), lambda i: (i, 0)),   # x streams over rows
            pl.BlockSpec((3, W), lambda i: (0, 0)),           # constants: same block
        ],
        out_specs=pl.BlockSpec((tile_rows, W), lambda i: (i, 0)),
        compiler_params=pltpu.CompilerParams(
            dimension_semantics=("parallel",),                # megacore split on v7x
        ),
        cost_estimate=pl.CostEstimate(
            flops=2 * n_rows * W,
            transcendentals=n_rows * W,
            bytes_accessed=n_rows * k * 4 + 3 * W * 4 + n_rows * W * 4,
        ),
    )(x2d, tbl)

    # Row-major no-copy view back to the module's (B, dim) shape.
    return out.reshape(B, dim)


def _reference(x: jax.Array, dim: int) -> jax.Array:
    freqs = _freq_table(dim)
    arg = x.astype(jnp.float32)[:, None] * freqs[None, :]
    return jnp.concatenate([jnp.sin(arg), jnp.cos(arg)], axis=-1)


if __name__ == "__main__":
    key = jax.random.PRNGKey(0)

    # Case 1: diffusion-style integer timesteps; lane-dense packed path (dim=64 -> k=2).
    B, dim = 8, 64
    x = jax.random.randint(key, (B,), 0, 1000).astype(jnp.float32)
    out = jax.block_until_ready(sinusoidal_pos_emb(x, dim))
    ref = _reference(x, dim)
    assert out.shape == (B, dim), out.shape
    # f32 tolerance: cos(t)=sin(t+pi/2) rewrite + transcendental impl differences
    # contribute O(ulp(|t|)) ~ 6e-5 at t ~ 1e3.
    assert jnp.allclose(out, ref, atol=1e-4, rtol=1e-4), \
        float(jnp.max(jnp.abs(out - ref)))

    # Case 2: B not divisible by the packing factor -> unpacked fallback path,
    # single full-array block (no padding, no trailing slice).
    B2, dim2 = 13, 32
    x2 = jax.random.randint(jax.random.PRNGKey(0), (B2,), 0, 1000).astype(jnp.float32)
    out2 = jax.block_until_ready(sinusoidal_pos_emb(x2, dim2))
    ref2 = _reference(x2, dim2)
    assert out2.shape == (B2, dim2), out2.shape
    assert jnp.allclose(out2, ref2, atol=1e-4, rtol=1e-4), \
        float(jnp.max(jnp.abs(out2 - ref2)))

    # Case 3: deeper packing (dim=16 -> k=8) exercises the static where-chain.
    B3, dim3 = 40, 16
    x3 = jax.random.randint(jax.random.PRNGKey(0), (B3,), 0, 1000).astype(jnp.float32)
    out3 = jax.block_until_ready(sinusoidal_pos_emb(x3, dim3))
    ref3 = _reference(x3, dim3)
    assert out3.shape == (B3, dim3), out3.shape
    assert jnp.allclose(out3, ref3, atol=1e-4, rtol=1e-4), \
        float(jnp.max(jnp.abs(out3 - ref3)))

    print("KERNEL_OK")
</pallas_src>

<mosaic_0001>
module attributes {stable_mosaic.version = 11 : i64} {
  func.func @kernel(%arg0: i32, %arg1: memref<4x2xf32, #tpu.memory_space<vmem>>, %arg2: memref<3x128xf32, #tpu.memory_space<vmem>>, %arg3: memref<4x128xf32, #tpu.memory_space<vmem>>) attributes {dimension_semantics = [#tpu.dimension_semantics<parallel>], iteration_bounds = array<i64: 1>, scalar_prefetch = 0 : i64, scratch_operands = 0 : i64, tpu.core_type = #tpu.core_type<tc>, window_params = [{transform_indices = @transform_0, window_bounds = array<i64: 4, 2>}, {pipeline_mode = #tpu.pipeline_mode<synchronous>, transform_indices = @transform_1, window_bounds = array<i64: 3, 128>}, {transform_indices = @transform_2, window_bounds = array<i64: 4, 128>}]} {
    %c0 = arith.constant 0 : index
    %c0_0 = arith.constant 0 : index
    %0 = vector.load %arg2[%c0, %c0_0] : memref<3x128xf32, #tpu.memory_space<vmem>>, vector<1x128xf32>
    %c1 = arith.constant 1 : index
    %c0_1 = arith.constant 0 : index
    %1 = vector.load %arg2[%c1, %c0_1] : memref<3x128xf32, #tpu.memory_space<vmem>>, vector<1x128xf32>
    %c2 = arith.constant 2 : index
    %c0_2 = arith.constant 0 : index
    %2 = vector.load %arg2[%c2, %c0_2] : memref<3x128xf32, #tpu.memory_space<vmem>>, vector<1x128xf32>
    %c0_3 = arith.constant 0 : index
    %c0_4 = arith.constant 0 : index
    %3 = vector.load %arg1[%c0_3, %c0_4] : memref<4x2xf32, #tpu.memory_space<vmem>>, vector<4x1xf32>
    %cst = arith.constant 1.000000e+00 : f32
    %4 = vector.broadcast %cst : f32 to vector<1x128xf32>
    %5 = arith.cmpf oeq, %2, %4 : vector<1x128xf32>
    %c0_5 = arith.constant 0 : index
    %c1_6 = arith.constant 1 : index
    %6 = vector.load %arg1[%c0_5, %c1_6] : memref<4x2xf32, #tpu.memory_space<vmem>>, vector<4x1xf32>
    %7 = vector.shape_cast %5 : vector<1x128xi1> to vector<1x128xi1>
    %8 = vector.broadcast %7 : vector<1x128xi1> to vector<4x128xi1>
    %9 = vector.shape_cast %6 : vector<4x1xf32> to vector<4x1xf32>
    %10 = vector.broadcast %9 : vector<4x1xf32> to vector<4x128xf32>
    %11 = vector.shape_cast %3 : vector<4x1xf32> to vector<4x1xf32>
    %12 = vector.broadcast %11 : vector<4x1xf32> to vector<4x128xf32>
    %13 = arith.select %8, %10, %12 : vector<4x128xi1>, vector<4x128xf32>
    %14 = vector.broadcast %0 : vector<1x128xf32> to vector<4x128xf32>
    %15 = arith.mulf %13, %14 : vector<4x128xf32>
    %16 = vector.broadcast %1 : vector<1x128xf32> to vector<4x128xf32>
    %17 = arith.addf %15, %16 : vector<4x128xf32>
    %18 = math.sin %17 : vector<4x128xf32>
    %c0_7 = arith.constant 0 : index
    %c0_8 = arith.constant 0 : index
    %19 = vector.load %arg3[%c0_7, %c0_8] : memref<4x128xf32, #tpu.memory_space<vmem>>, vector<4x128xf32>
    tpu.vector_store %arg3[%c0_7, %c0_8], %18 {strides = array<i32>} : memref<4x128xf32, #tpu.memory_space<vmem>>, vector<4x128xf32>,
    return
  }
  func.func @transform_0(%arg0: i32) -> (i32, i32) {
    %c0_i32 = arith.constant 0 : i32
    %c0_i32_0 = arith.constant 0 : i32
    return %arg0, %c0_i32 : i32, i32
  }
  func.func @transform_1(%arg0: i32) -> (i32, i32) {
    %c0_i32 = arith.constant 0 : i32
    %c0_i32_0 = arith.constant 0 : i32
    %c0_i32_1 = arith.constant 0 : i32
    return %c0_i32, %c0_i32_0 : i32, i32
  }
  func.func @transform_2(%arg0: i32) -> (i32, i32) {
    %c0_i32 = arith.constant 0 : i32
    %c0_i32_0 = arith.constant 0 : i32
    return %arg0, %c0_i32 : i32, i32
  }
}

</mosaic_0001>

<llo_original>
// kernel: tpu_custom_call.1
$region0: #{tpu_custom_call.1}
  #allocation0 [shape = 'u32[]', space=smem, size = 0x4, offset = 0x4, fixed_abs, tag = 'smem constant byte address 0x4 - core index']
  #allocation1 [shape = 'u32[144,128]{1,0:T(1,128)}', space=vmem, size = 0x12000, scoped, tag = 'internal scratch']
  %s0 = inlined_call_operand.vmem [shape: f32[4,2], index: 0, kind: input, shape index: {}]
  %s1 = inlined_call_operand.vmem [shape: f32[3,128], index: 1, kind: input, shape index: {}]
  %s2 = inlined_call_operand.hbm [shape: f32[4,128], index: 2, kind: output, shape index: {}]
  %s3 = sld [smem:[#allocation0]]
  $region18: #{tpu_custom_call.1} parent=0
    _
  %s5 = ssub.s32 1, %s3
  %s6 = scalar_select 0, %s5, %s3
  $region1: #{tpu_custom_call.1} parent=0
    #allocation2 [shape = 'u8[2048]{0}', space=vmem, size = 0x800, scoped, tag = 'output window, operand 0, single buffered']
    #allocation3 [shape = 's32[1]{0}', space=sflag, size = 0x4, scoped, tag = 'scoped memory for tpu_custom_call.1']
    %7 = vsyncpa [#allocation3], 0
    // Predicated region
    $region2: #{tpu_custom_call.1} parent=1 // pred_check
      _
    $region3: #{tpu_custom_call.1} parent=1 // pred_check_branch
      %9 = sbr.rel (0) target = $region5
    $region4: #{tpu_custom_call.1} parent=1 // pred_region
      _
    $region5: #{tpu_custom_call.1} parent=1 // pred_fallthru
      _
    // Predicated region
    $region6: #{tpu_custom_call.1} parent=1 // pred_check
      _
    $region7: #{tpu_custom_call.1} parent=1 // pred_check_branch
      %11 = sbr.rel (0) target = $region9
    $region8: #{tpu_custom_call.1} parent=1 // pred_region
      _
    $region9: #{tpu_custom_call.1} parent=1 // pred_fallthru
      _
    %v12 = vld [vmem:[%s1] sm:$0x1]
    %v13 = vld [vmem:[%s1 + $0x1] sm:$0x1]
    %v14 = vld [vmem:[%s1 + $0x2] sm:$0x1]
    %v15 = vld [vmem:[%s0] sm:$0xf]
    %vm16 = vcmp.eq.f32.partialorder %v14, 1.0
    %v17 = vsel %vm16, 1, 0
    %v18 = vlaneseq
    %v19 = vshrl.u32 %v18, 7
    %v20 = vsub.s32 0, %v19
    %v21 = vrot.slane %v17, %v20
    %vm22 = vcmp.eq.s32.totalorder %v21, 1
    %24 = vset.pattern.permute.xlu0 1
    %25 = vperm.xlu0 %24, %v15
    %v26 = vpop.permute.xlu0 %25
    %28 = vset.pattern.permute.xlu0 0
    %29 = vperm.xlu0 %28, %v15
    %v30 = vpop.permute.xlu0 %29
    %v32 = vsel %vm22, %v26, %v30
    %v33 = vlaneseq
    %v34 = vshrl.u32 %v33, 7
    %v35 = vsub.s32 0, %v34
    %v36 = vrot.slane %v12, %v35
    %v37 = vmul.f32 %v32, %v36
    %v38 = vlaneseq
    %v39 = vshrl.u32 %v38, 7
    %v40 = vsub.s32 0, %v39
    %v41 = vrot.slane %v13, %v40
    %v42 = vadd.f32 %v37, %v41
    %v43 = vand.u32 2147483647, %v42
    %vm44 = vcmp.le.f32.partialorder %v43, 0.7853982
    %vm45 = vcmp.lt.s32.totalorder %v42, 0
    %v46 = vand.u32 %v42, 2139095040
    %v47 = vshrl.u32 %v46, 23
    %v48 = vsub.s32 %v47, 127
    %v49 = vand.u32 2147483647, %v42
    %v50 = vand.u32 %v49, 8388607
    %v51 = vor.u32 %v50, 8388608
    %v52 = vsub.s32 0, %v51
    %v53 = vadd.s32 %v48, 1
    %vm54 = vcmp.gt.s32.totalorder %v53, 0
    %v55 = vsel %vm54, %v53, 0
    %v56 = vshrl.u32 %v55, 5
    %v57 = vand.u32 %v55, 31
    %v58 = vsub.s32 32, %v57
    %v59 = vshrl.u32 683565275, %v58
    %v60 = vshll.u32 683565275, %v57
    %v61 = vshrl.u32 2475754826, %v58
    %v62 = vor.u32 %v60, %v61
    %v63 = vshll.u32 2475754826, %v57
    %v64 = vshrl.u32 2131351028, %v58
    %v65 = vor.u32 %v63, %v64
    %v66 = vshll.u32 2131351028, %v57
    %v67 = vshrl.u32 2102212464, %v58
    %v68 = vor.u32 %v66, %v67
    %v69 = vshll.u32 2102212464, %v57
    %v70 = vshrl.u32 920167782, %v58
    %v71 = vor.u32 %v69, %v70
    %v72 = vshll.u32 920167782, %v57
    %v73 = vshrl.u32 1326507024, %v58
    %v74 = vor.u32 %v72, %v73
    %vm75 = vcmp.lt.s32.totalorder %v56, 1
    %vm76 = vcmp.lt.s32.totalorder %v56, 2
    %vm77 = vcmp.lt.s32.totalorder %v56, 3
    %vm78 = vcmp.lt.s32.totalorder %v56, 4
    %v79 = vsel %vm75, %v59, %v62
    %v80 = vsel %vm78, %v68, 2102212464
    %v81 = vsel %vm77, %v65, %v80
    %v82 = vsel %vm76, %v79, %v81
    %v83 = vsel %vm75, %v62, %v65
    %v84 = vsel %vm78, %v71, 920167782
    %v85 = vsel %vm77, %v68, %v84
    %v86 = vsel %vm76, %v83, %v85
    %v87 = vsel %vm75, %v65, %v68
    %v88 = vsel %vm78, %v74, 1326507024
    %v89 = vsel %vm77, %v71, %v88
    %v90 = vsel %vm76, %v87, %v89
    %v91 = vshll.u32 %v51, 8
    %v92 = vmul.u32.u64.compose %v91, %v90
    %v93 = vextract.low.u32 %v92
    %v94 = vextract.high.u32 %v92
    %v95 = vmul.u32.u64.compose %v91, %v86
    %v96 = vextract.low.u32 %v95
    %v97 = vextract.high.u32 %v95
    %v98 = vmul.u32 %v91, %v82
    %v99 = vadd.s32 %v94, %v96
    %vm100 = vc.u32 %v94, %v96
    %v101 = vadd.s32 %v97, 1
    %v102 = vsel %vm100, %v101, %v97
    %v103 = vadd.s32 %v98, %v102
    %v104 = vadd.s32 %v103, 536870912
    %v105 = vshrl.u32 %v104, 30
    %v106 = vshll.u32 %v105, 30
    %v107 = vsub.s32 %v103, %v106
    %vm108 = vcmp.lt.s32.totalorder %v107, 0
    %v109 = vsub.s32 0, %v107
    %v110 = vsel %vm108, %v109, %v107
    %v111 = vclz %v110
    %v112 = vsub.s32 %v111, 2
    %vm113 = vcmp.gt.s32.totalorder 0, %v112
    %v114 = vsel %vm113, 0, %v112
    %v115 = vsub.s32 32, %v114
    %v116 = vshll.u32 %v107, %v114
    %v117 = vshrl.u32 %v99, %v115
    %v118 = vor.u32 %v116, %v117
    %v119 = vsub.s32 4294967266, %v114
    %v120 = vadd.s32 %v119, 127
    %v121 = vshll.u32 %v120, 23
    %v122 = vor.u32 4788187, %v121
    %v123 = vand.u32 2147483647, %v122
    %v125 = vcvt.s32.f32 %v118
    %v126 = vmul.f32 %v125, %v123
    %v127 = vxor.u32 %v126, 2147483648
    %v128 = vsel %vm45, %v127, %v126
    %v129 = vsub.s32 4, %v105
    %v130 = vsel %vm45, %v129, %v105
    %v131 = vsel %vm44, %v42, %v128
    %v132 = vsel %vm44, 0, %v130
    %v133 = vcosq.f32.pop %v131
    %v134 = vsinq.f32.pop %v131
    %vm135 = vweird.f32 %v42
    %v136 = vadd.s32 %v132, 3
    %v137 = vand.u32 %v136, 3
    %vm138 = vcmp.lt.s32.totalorder %v137, 2
    %vm139 = vcmp.eq.s32.totalorder %v137, 0
    %v140 = vxor.u32 %v134, 2147483648
    %v141 = vsel %vm139, %v133, %v140
    %vm142 = vcmp.eq.s32.totalorder %v137, 2
    %v143 = vxor.u32 %v133, 2147483648
    %v144 = vsel %vm142, %v143, %v134
    %v145 = vsel %vm138, %v141, %v144
    %v146 = vsel %vm135, nan, %v145
    %147 = vst [vmem:[#allocation2] sm:$0xf] %v146
    // Predicated region
    $region10: #{tpu_custom_call.1} parent=1 // pred_check
      _
    $region11: #{tpu_custom_call.1} parent=1 // pred_check_branch
      %149 = sbr.rel (0) target = $region13
    $region12: #{tpu_custom_call.1} parent=1 // pred_region
      %s151 = ssub.s32 64, 64
      %152 = vsyncadd [#allocation3], %s151
      %s154 = sshll.u32 [#allocation2], 4
      %s155 = int_to_ptr.vmem [resolvable:$true] %s154
      %157 = dma.vmem_to_hbm [thread:$0]  %s155, 64, %s2, [#allocation3]
    $region13: #{tpu_custom_call.1} parent=1 // pred_fallthru
      _
    // Predicated region
    $region14: #{tpu_custom_call.1} parent=1 // pred_check
      _
    $region15: #{tpu_custom_call.1} parent=1 // pred_check_branch
      %159 = sbr.rel (0) target = $region17
    $region16: #{tpu_custom_call.1} parent=1 // pred_region
      %160 = dma.done [#allocation3], 64
    $region17: #{tpu_custom_call.1} parent=1 // pred_fallthru
      _
    %161 = vsyncpa [#allocation3], 1

</llo_original>
